<compile_context>
chip_gen: v7x
topology: tpu7x:2x2x1
jax: 0.10.0
libtpu: 0.0.40
codegen_flags: <defaults>
</compile_context>

<pallas_src>
import functools

import jax
import jax.numpy as jnp
from jax.experimental import pallas as pl
from jax.experimental.pallas import tpu as pltpu


def _fnn_kernel(num_layers, din, t_ref, *refs):
    """Whole-MLP kernel for one batch tile.

    Layout: activations are (features, bm); weights are (out, in); biases
    are (out, 1).

    refs = (w0, b0, w1, b1, ..., w{L-1}, b{L-1}, out_ref)
    """
    out_ref = refs[-1]
    param_refs = refs[:-1]

    x = t_ref[...]  # (din, bm) float32 (normalization already folded into W0/b0)

    for l in range(num_layers):
        w = param_refs[2 * l][...]        # (out, in)
        b = param_refs[2 * l + 1][...]    # (out, 1)
        if l == 0 and din == 1:
            # K=1 contraction == outer product: do it as a VPU broadcast FMA
            # instead of a degenerate MXU matmul.
            x = w * x + b                 # (out,1)*(1,bm) + (out,1) -> (out,bm)
        else:
            x = jnp.dot(w, x, preferred_element_type=jnp.float32) + b
        if l < num_layers - 1:
            x = jnp.tanh(x)

    out_ref[...] = x.astype(out_ref.dtype)


def fnn_forward(t, tmin, tmax, params, *, bm=256):
    """Pallas FNN forward.

    t:      (N, din) float32
    tmin, tmax: scalars (note: tmax must differ from tmin, as in the torch code)
    params: list of (W, b) in PyTorch-native layout: W (out, in), b (out,)
    bm:     batch tile (multiple of 128 for lane-dense tiles)
    """
    N, din = t.shape
    num_layers = len(params)
    dout = params[-1][0].shape[0]
    assert bm % 128 == 0, "bm must be a multiple of 128 for lane-dense tiles"

    tminf = jnp.float32(tmin)
    tmaxf = jnp.float32(tmax)

    # Fold  x_norm = a*t + c  (a = 2/(tmax-tmin), c = -2*tmin/(tmax-tmin) - 1)
    # into the first layer:  W0 @ x_norm + b0 = (a*W0) @ t + (b0 + c*W0.sum(in)).
    a = 2.0 / (tmaxf - tminf)
    c = -2.0 * tminf / (tmaxf - tminf) - 1.0

    w0, b0 = params[0]
    w0 = w0.astype(jnp.float32)
    b0 = b0.reshape(-1, 1).astype(jnp.float32)
    w0f = a * w0
    b0f = b0 + c * jnp.sum(w0, axis=1, keepdims=True)

    flat_params = [w0f, b0f]
    for (w, b) in params[1:]:
        flat_params.append(w.astype(jnp.float32))
        flat_params.append(b.reshape(-1, 1).astype(jnp.float32))

    # Pad batch to a multiple of bm and put batch on the lane (last) axis.
    n_pad = ((N + bm - 1) // bm) * bm
    t_t = jnp.zeros((din, n_pad), jnp.float32).at[:, :N].set(
        t.astype(jnp.float32).T)

    in_specs = [pl.BlockSpec((din, bm), lambda i: (0, i))]
    for arr in flat_params:
        # Whole-array blocks, constant index -> fetched once, resident in VMEM.
        in_specs.append(pl.BlockSpec(arr.shape, lambda i: (0, 0)))

    out_spec = pl.BlockSpec((dout, bm), lambda i: (0, i))

    kernel = functools.partial(_fnn_kernel, num_layers, din)

    out_t = pl.pallas_call(
        kernel,
        out_shape=jax.ShapeDtypeStruct((dout, n_pad), jnp.float32),
        grid_spec=pltpu.PrefetchScalarGridSpec(
            num_scalar_prefetch=0,
            grid=(n_pad // bm,),
            in_specs=in_specs,
            out_specs=out_spec,
        ),
        compiler_params=pltpu.CompilerParams(
            dimension_semantics=("parallel",)),
    )(t_t, *flat_params)

    # Back to (N, dout) row-major like the torch module.
    return out_t[:, :N].T


def init_params(layers, key):
    """Mimic nn.Linear init: U(-1/sqrt(fan_in), 1/sqrt(fan_in)).

    Returns PyTorch-native layout: W (out, in), b (out,).
    """
    params = []
    for l in range(1, len(layers)):
        fan_in, fan_out = layers[l - 1], layers[l]
        key, kw, kb = jax.random.split(key, 3)
        bound = 1.0 / jnp.sqrt(fan_in)
        w = jax.random.uniform(kw, (fan_out, fan_in), jnp.float32, -bound, bound)
        b = jax.random.uniform(kb, (fan_out,), jnp.float32, -bound, bound)
        params.append((w, b))
    return params


def fnn_reference(t, tmin, tmax, params):
    x = 2.0 * (t - tmin) / (tmax - tmin) - 1.0
    for (w, b) in params[:-1]:
        x = jnp.tanh(x @ w.T + b)
    w, b = params[-1]
    return x @ w.T + b


if __name__ == "__main__":
    key = jax.random.PRNGKey(0)
    layers = [1, 32, 32, 1]   # typical PINN: scalar time -> hidden -> scalar output
    N = 300                   # not a multiple of bm -> exercises padding path
    bm = 256
    tmin, tmax = 0.0, 10.0

    key, kt = jax.random.split(key)
    t = jax.random.uniform(kt, (N, layers[0]), jnp.float32, tmin, tmax)
    params = init_params(layers, key)

    out = fnn_forward(t, tmin, tmax, params, bm=bm)
    out = jax.block_until_ready(out)

    ref = fnn_reference(t, tmin, tmax, params)
    assert out.shape == (N, layers[-1])
    assert jnp.allclose(out, ref, atol=1e-5, rtol=1e-5), (
        f"max abs err {jnp.max(jnp.abs(out - ref))}")

    print("KERNEL_OK")
</pallas_src>

<mosaic_0001>
module attributes {stable_mosaic.version = 11 : i64} {
  func.func @_fnn_kernel(%arg0: i32, %arg1: memref<1x256xf32, #tpu.memory_space<vmem>>, %arg2: memref<32x1xf32, #tpu.memory_space<vmem>>, %arg3: memref<32x1xf32, #tpu.memory_space<vmem>>, %arg4: memref<32x32xf32, #tpu.memory_space<vmem>>, %arg5: memref<32x1xf32, #tpu.memory_space<vmem>>, %arg6: memref<1x32xf32, #tpu.memory_space<vmem>>, %arg7: memref<1x1xf32, #tpu.memory_space<vmem>>, %arg8: memref<1x256xf32, #tpu.memory_space<vmem>>) attributes {dimension_semantics = [#tpu.dimension_semantics<parallel>], iteration_bounds = array<i64: 2>, scalar_prefetch = 0 : i64, scratch_operands = 0 : i64, tpu.core_type = #tpu.core_type<tc>, window_params = [{transform_indices = @transform_0, window_bounds = array<i64: 1, 256>}, {pipeline_mode = #tpu.pipeline_mode<synchronous>, transform_indices = @transform_1, window_bounds = array<i64: 32, 1>}, {pipeline_mode = #tpu.pipeline_mode<synchronous>, transform_indices = @transform_2, window_bounds = array<i64: 32, 1>}, {pipeline_mode = #tpu.pipeline_mode<synchronous>, transform_indices = @transform_3, window_bounds = array<i64: 32, 32>}, {pipeline_mode = #tpu.pipeline_mode<synchronous>, transform_indices = @transform_4, window_bounds = array<i64: 32, 1>}, {pipeline_mode = #tpu.pipeline_mode<synchronous>, transform_indices = @transform_5, window_bounds = array<i64: 1, 32>}, {pipeline_mode = #tpu.pipeline_mode<synchronous>, transform_indices = @transform_6, window_bounds = array<i64: 1, 1>}, {transform_indices = @transform_7, window_bounds = array<i64: 1, 256>}]} {
    %c0 = arith.constant 0 : index
    %c0_0 = arith.constant 0 : index
    %0 = vector.load %arg1[%c0, %c0_0] : memref<1x256xf32, #tpu.memory_space<vmem>>, vector<1x256xf32>
    %c0_1 = arith.constant 0 : index
    %c0_2 = arith.constant 0 : index
    %1 = vector.load %arg2[%c0_1, %c0_2] : memref<32x1xf32, #tpu.memory_space<vmem>>, vector<32x1xf32>
    %c0_3 = arith.constant 0 : index
    %c0_4 = arith.constant 0 : index
    %2 = vector.load %arg3[%c0_3, %c0_4] : memref<32x1xf32, #tpu.memory_space<vmem>>, vector<32x1xf32>
    %3 = vector.broadcast %1 : vector<32x1xf32> to vector<32x256xf32>
    %4 = vector.broadcast %0 : vector<1x256xf32> to vector<32x256xf32>
    %5 = arith.mulf %3, %4 : vector<32x256xf32>
    %6 = vector.broadcast %2 : vector<32x1xf32> to vector<32x256xf32>
    %7 = arith.addf %5, %6 : vector<32x256xf32>
    %8 = math.tanh %7 : vector<32x256xf32>
    %c0_5 = arith.constant 0 : index
    %c0_6 = arith.constant 0 : index
    %9 = vector.load %arg4[%c0_5, %c0_6] : memref<32x32xf32, #tpu.memory_space<vmem>>, vector<32x32xf32>
    %c0_7 = arith.constant 0 : index
    %c0_8 = arith.constant 0 : index
    %10 = vector.load %arg5[%c0_7, %c0_8] : memref<32x1xf32, #tpu.memory_space<vmem>>, vector<32x1xf32>
    %cst = arith.constant dense<0.000000e+00> : vector<32x256xf32>
    %11 = tpu.matmul %9, %8, %cst {dimension_numbers = #tpu.dot_dimension_numbers<[1], [0], [0], [1], [0, 0, 1, 1], [], []>} : vector<32x32xf32>, vector<32x256xf32>, vector<32x256xf32> -> vector<32x256xf32>
    %12 = vector.broadcast %10 : vector<32x1xf32> to vector<32x256xf32>
    %13 = arith.addf %11, %12 : vector<32x256xf32>
    %14 = math.tanh %13 : vector<32x256xf32>
    %c0_9 = arith.constant 0 : index
    %c0_10 = arith.constant 0 : index
    %15 = vector.load %arg6[%c0_9, %c0_10] : memref<1x32xf32, #tpu.memory_space<vmem>>, vector<1x32xf32>
    %c0_11 = arith.constant 0 : index
    %c0_12 = arith.constant 0 : index
    %16 = vector.load %arg7[%c0_11, %c0_12] : memref<1x1xf32, #tpu.memory_space<vmem>>, vector<1x1xf32>
    %cst_13 = arith.constant dense<0.000000e+00> : vector<1x256xf32>
    %17 = tpu.matmul %15, %14, %cst_13 {dimension_numbers = #tpu.dot_dimension_numbers<[1], [0], [0], [1], [0, 0, 1, 1], [], []>} : vector<1x32xf32>, vector<32x256xf32>, vector<1x256xf32> -> vector<1x256xf32>
    %18 = vector.broadcast %16 : vector<1x1xf32> to vector<1x256xf32>
    %19 = arith.addf %17, %18 : vector<1x256xf32>
    %c0_14 = arith.constant 0 : index
    %c0_15 = arith.constant 0 : index
    %20 = vector.load %arg8[%c0_14, %c0_15] : memref<1x256xf32, #tpu.memory_space<vmem>>, vector<1x256xf32>
    tpu.vector_store %arg8[%c0_14, %c0_15], %19 {strides = array<i32>} : memref<1x256xf32, #tpu.memory_space<vmem>>, vector<1x256xf32>,
    return
  }
  func.func @transform_0(%arg0: i32) -> (i32, i32) {
    %c0_i32 = arith.constant 0 : i32
    %c0_i32_0 = arith.constant 0 : i32
    return %c0_i32, %arg0 : i32, i32
  }
  func.func @transform_1(%arg0: i32) -> (i32, i32) {
    %c0_i32 = arith.constant 0 : i32
    %c0_i32_0 = arith.constant 0 : i32
    %c0_i32_1 = arith.constant 0 : i32
    return %c0_i32, %c0_i32_0 : i32, i32
  }
  func.func @transform_2(%arg0: i32) -> (i32, i32) {
    %c0_i32 = arith.constant 0 : i32
    %c0_i32_0 = arith.constant 0 : i32
    %c0_i32_1 = arith.constant 0 : i32
    return %c0_i32, %c0_i32_0 : i32, i32
  }
  func.func @transform_3(%arg0: i32) -> (i32, i32) {
    %c0_i32 = arith.constant 0 : i32
    %c0_i32_0 = arith.constant 0 : i32
    %c0_i32_1 = arith.constant 0 : i32
    return %c0_i32, %c0_i32_0 : i32, i32
  }
  func.func @transform_4(%arg0: i32) -> (i32, i32) {
    %c0_i32 = arith.constant 0 : i32
    %c0_i32_0 = arith.constant 0 : i32
    %c0_i32_1 = arith.constant 0 : i32
    return %c0_i32, %c0_i32_0 : i32, i32
  }
  func.func @transform_5(%arg0: i32) -> (i32, i32) {
    %c0_i32 = arith.constant 0 : i32
    %c0_i32_0 = arith.constant 0 : i32
    %c0_i32_1 = arith.constant 0 : i32
    return %c0_i32, %c0_i32_0 : i32, i32
  }
  func.func @transform_6(%arg0: i32) -> (i32, i32) {
    %c0_i32 = arith.constant 0 : i32
    %c0_i32_0 = arith.constant 0 : i32
    %c0_i32_1 = arith.constant 0 : i32
    return %c0_i32, %c0_i32_0 : i32, i32
  }
  func.func @transform_7(%arg0: i32) -> (i32, i32) {
    %c0_i32 = arith.constant 0 : i32
    %c0_i32_0 = arith.constant 0 : i32
    return %c0_i32, %arg0 : i32, i32
  }
}

</mosaic_0001>

<llo_original>
// kernel: tpu_custom_call.1
$region0: #{tpu_custom_call.1}
  #allocation0 [shape = 'u32[]', space=smem, size = 0x4, offset = 0x4, fixed_abs, tag = 'smem constant byte address 0x4 - core index']
  #allocation1 [shape = 'u32[144,128]{1,0:T(1,128)}', space=vmem, size = 0x12000, scoped, tag = 'internal scratch']
  #allocation2 [shape = 'f32[1,1]{1,0:T(1,128)S(1)}', space=vmem, size = 0x200, scoped, tag = 'scoped memory for tpu_custom_call.1']
  %s0 = inlined_call_operand.vmem [shape: f32[1,512], index: 0, kind: input, shape index: {}]
  %s1 = inlined_call_operand.vmem [shape: f32[32,1], index: 1, kind: input, shape index: {}]
  %s2 = inlined_call_operand.vmem [shape: f32[32,1], index: 2, kind: input, shape index: {}]
  %s3 = inlined_call_operand.vmem [shape: f32[32,32], index: 3, kind: input, shape index: {}]
  %s4 = inlined_call_operand.vmem [shape: f32[32,1], index: 4, kind: input, shape index: {}]
  %s5 = inlined_call_operand.vmem [shape: f32[1,32], index: 5, kind: input, shape index: {}]
  %s6 = inlined_call_operand.<no memory space> [shape: f32[1,1], index: 6, kind: input, shape index: {}]
  %s7 = inlined_call_operand.hbm [shape: f32[1,512], index: 7, kind: output, shape index: {}]
  %s8 = sld [smem:[#allocation0]]
  $region61: #{tpu_custom_call.1} parent=0
    _
  %s10 = ssub.s32 1, %s8
  %s11 = scalar_select 0, %s10, %s8
  %v12 = vstv %s6
  %13 = vst [vmem:[#allocation2] sm:$0x1] %v12
  $region1: #{tpu_custom_call.1} parent=0
    #allocation3 [shape = 'u8[2048]{0}', space=vmem, size = 0x800, scoped, tag = 'output window, operand 0']
    #allocation4 [shape = 's32[2]{0}', space=sflag, size = 0x8, scoped, tag = 'scoped memory for tpu_custom_call.1']
    %14 = vsyncpa [#allocation4], 0
    %s15 = scalar_lea.sflag [#allocation4], 1
    %16 = vsyncpa %s15, 0
    loop: start=0, step=1, limit=4
    $region2: #{tpu_custom_call.1} parent=1 // loop_pre_header
      _
    $region3: #{tpu_custom_call.1} parent=1 // loop_header
      %s18 = sphi 0, %s22
      %p19 = scmp.ge.s32.totalorder %s18, 4
      %s28 = sphi 0, %s30
      %s31 = sphi 0, %s28
      %s32 = sphi 0, %s31
      %s48 = sphi 0, %s32
      %s52 = sphi 0, %s52
      %s54 = sphi 0, %s52
      %s55 = sphi 0, %s54
      %s69 = sphi 0, %s55
      %s73 = sphi 0, %s73
      %s75 = sphi 0, %s73
      %s76 = sphi 0, %s75
      %s90 = sphi 0, %s76
      %s94 = sphi 0, %s94
      %s96 = sphi 0, %s94
      %s97 = sphi 0, %s96
      %s111 = sphi 0, %s97
      %s115 = sphi 0, %s115
      %s117 = sphi 0, %s115
      %s118 = sphi 0, %s117
      %s132 = sphi 0, %s118
      %s136 = sphi 0, %s136
      %s138 = sphi 0, %s136
      %s139 = sphi 0, %s138
      %s153 = sphi 0, %s139
      %s157 = sphi 0, %s157
      %s159 = sphi 0, %s157
      %s160 = sphi 0, %s159
      %s174 = sphi 0, %s160
      %s180 = sphi 0, %s182
      %s183 = sphi 0, %s180
      %s184 = sphi 0, %s183
      %s200 = sphi 0, %s184
    $region4: #{tpu_custom_call.1} parent=1 // loop_header_branch
      %21 = sbr.rel (%p19) target = $region8
    $region5: #{tpu_custom_call.1} parent=1 // loop_body
      %s23 = ssub.s32 %s18, 1
      %s24 = ssub.s32 %s18, 2
      %s25 = sadd.s32 %s18, 1
      %s26 = ssub.s32 %s18, %s25
      %p27 = scmp.eq.s32.totalorder %s26, 0
      %s29 = sadd.s32 %s28, 1
      %s30 = scalar_select %p27, %s28, %s29
      %p33 = pneg %p27
      %p34 = scmp.eq.s32.totalorder %s18, 1
      %p35 = por %p33, %p34
      %p36 = scmp.ne.s32.totalorder %s28, %s31
      %p37 = scmp.eq.s32.totalorder %s18, 0
      %p38 = por %p36, %p37
      %p39 = scmp.ne.s32.totalorder %s28, %s31
      %p40 = scmp.eq.s32.totalorder %s23, 1
      %p41 = por %p39, %p40
      %p42 = scmp.ne.s32.totalorder %s31, %s32
      %p43 = scmp.eq.s32.totalorder %s23, 0
      %p44 = por %p42, %p43
      %p45 = scmp.ne.s32.totalorder %s31, %s32
      %p46 = scmp.eq.s32.totalorder %s24, 1
      %p47 = por %p45, %p46
      %p49 = scmp.ne.s32.totalorder %s32, %s48
      %p50 = scmp.eq.s32.totalorder %s24, 0
      %p51 = por %p49, %p50
      %s53 = sadd.s32 %s52, 1
      %p56 = scmp.eq.s32.totalorder %s18, 1
      %p57 = scmp.ne.s32.totalorder %s52, %s54
      %p58 = scmp.eq.s32.totalorder %s18, 0
      %p59 = por %p57, %p58
      %p60 = scmp.ne.s32.totalorder %s52, %s54
      %p61 = scmp.eq.s32.totalorder %s23, 1
      %p62 = por %p60, %p61
      %p63 = scmp.ne.s32.totalorder %s54, %s55
      %p64 = scmp.eq.s32.totalorder %s23, 0
      %p65 = por %p63, %p64
      %p66 = scmp.ne.s32.totalorder %s54, %s55
      %p67 = scmp.eq.s32.totalorder %s24, 1
      %p68 = por %p66, %p67
      %p70 = scmp.ne.s32.totalorder %s55, %s69
      %p71 = scmp.eq.s32.totalorder %s24, 0
      %p72 = por %p70, %p71
      %s74 = sadd.s32 %s73, 1
      %p77 = scmp.eq.s32.totalorder %s18, 1
      %p78 = scmp.ne.s32.totalorder %s73, %s75
      %p79 = scmp.eq.s32.totalorder %s18, 0
      %p80 = por %p78, %p79
      %p81 = scmp.ne.s32.totalorder %s73, %s75
      %p82 = scmp.eq.s32.totalorder %s23, 1
      %p83 = por %p81, %p82
      %p84 = scmp.ne.s32.totalorder %s75, %s76
      %p85 = scmp.eq.s32.totalorder %s23, 0
      %p86 = por %p84, %p85
      %p87 = scmp.ne.s32.totalorder %s75, %s76
      %p88 = scmp.eq.s32.totalorder %s24, 1
      %p89 = por %p87, %p88
      %p91 = scmp.ne.s32.totalorder %s76, %s90
      %p92 = scmp.eq.s32.totalorder %s24, 0
      %p93 = por %p91, %p92
      %s95 = sadd.s32 %s94, 1
      %p98 = scmp.eq.s32.totalorder %s18, 1
      %p99 = scmp.ne.s32.totalorder %s94, %s96
      %p100 = scmp.eq.s32.totalorder %s18, 0
      %p101 = por %p99, %p100
      %p102 = scmp.ne.s32.totalorder %s94, %s96
      %p103 = scmp.eq.s32.totalorder %s23, 1
      %p104 = por %p102, %p103
      %p105 = scmp.ne.s32.totalorder %s96, %s97
      %p106 = scmp.eq.s32.totalorder %s23, 0
      %p107 = por %p105, %p106
      %p108 = scmp.ne.s32.totalorder %s96, %s97
      %p109 = scmp.eq.s32.totalorder %s24, 1
      %p110 = por %p108, %p109
      %p112 = scmp.ne.s32.totalorder %s97, %s111
      %p113 = scmp.eq.s32.totalorder %s24, 0
      %p114 = por %p112, %p113
      %s116 = sadd.s32 %s115, 1
      %p119 = scmp.eq.s32.totalorder %s18, 1
      %p120 = scmp.ne.s32.totalorder %s115, %s117
      %p121 = scmp.eq.s32.totalorder %s18, 0
      %p122 = por %p120, %p121
      %p123 = scmp.ne.s32.totalorder %s115, %s117
      %p124 = scmp.eq.s32.totalorder %s23, 1
      %p125 = por %p123, %p124
      %p126 = scmp.ne.s32.totalorder %s117, %s118
      %p127 = scmp.eq.s32.totalorder %s23, 0
      %p128 = por %p126, %p127
      %p129 = scmp.ne.s32.totalorder %s117, %s118
      %p130 = scmp.eq.s32.totalorder %s24, 1
      %p131 = por %p129, %p130
      %p133 = scmp.ne.s32.totalorder %s118, %s132
      %p134 = scmp.eq.s32.totalorder %s24, 0
      %p135 = por %p133, %p134
      %s137 = sadd.s32 %s136, 1
      %p140 = scmp.eq.s32.totalorder %s18, 1
      %p141 = scmp.ne.s32.totalorder %s136, %s138
      %p142 = scmp.eq.s32.totalorder %s18, 0
      %p143 = por %p141, %p142
      %p144 = scmp.ne.s32.totalorder %s136, %s138
      %p145 = scmp.eq.s32.totalorder %s23, 1
      %p146 = por %p144, %p145
      %p147 = scmp.ne.s32.totalorder %s138, %s139
      %p148 = scmp.eq.s32.totalorder %s23, 0
      %p149 = por %p147, %p148
      %p150 = scmp.ne.s32.totalorder %s138, %s139
      %p151 = scmp.eq.s32.totalorder %s24, 1
      %p152 = por %p150, %p151
      %p154 = scmp.ne.s32.totalorder %s139, %s153
      %p155 = scmp.eq.s32.totalorder %s24, 0
      %p156 = por %p154, %p155
      %s158 = sadd.s32 %s157, 1
      %p161 = scmp.eq.s32.totalorder %s18, 1
      %p162 = scmp.ne.s32.totalorder %s157, %s159
      %p163 = scmp.eq.s32.totalorder %s18, 0
      %p164 = por %p162, %p163
      %p165 = scmp.ne.s32.totalorder %s157, %s159
      %p166 = scmp.eq.s32.totalorder %s23, 1
      %p167 = por %p165, %p166
      %p168 = scmp.ne.s32.totalorder %s159, %s160
      %p169 = scmp.eq.s32.totalorder %s23, 0
      %p170 = por %p168, %p169
      %p171 = scmp.ne.s32.totalorder %s159, %s160
      %p172 = scmp.eq.s32.totalorder %s24, 1
      %p173 = por %p171, %p172
      %p175 = scmp.ne.s32.totalorder %s160, %s174
      %p176 = scmp.eq.s32.totalorder %s24, 0
      %p177 = por %p175, %p176
      %s178 = ssub.s32 %s18, %s25
      %p179 = scmp.eq.s32.totalorder %s178, 0
      %s181 = sadd.s32 %s180, 1
      %s182 = scalar_select %p179, %s180, %s181
      %p185 = pneg %p179
      %p186 = scmp.eq.s32.totalorder %s18, 1
      %p187 = por %p185, %p186
      %p188 = scmp.ne.s32.totalorder %s180, %s183
      %p189 = scmp.eq.s32.totalorder %s18, 0
      %p190 = por %p188, %p189
      %p191 = scmp.ne.s32.totalorder %s180, %s183
      %p192 = scmp.eq.s32.totalorder %s23, 1
      %p193 = por %p191, %p192
      %p194 = scmp.ne.s32.totalorder %s183, %s184
      %p195 = scmp.eq.s32.totalorder %s23, 0
      %p196 = por %p194, %p195
      %p197 = scmp.ne.s32.totalorder %s183, %s184
      %p198 = scmp.eq.s32.totalorder %s24, 1
      %p199 = por %p197, %p198
      %p201 = scmp.ne.s32.totalorder %s184, %s200
      %p202 = scmp.eq.s32.totalorder %s24, 0
      %p203 = por %p201, %p202
      %p204 = scmp.le.s32.totalorder 1, %s18
      %p205 = scmp.lt.s32.totalorder %s18, 3
      %p206 = pnand %p204, %p205
      %p207 = pneg %p206
      // Predicated region
      $region9: #{tpu_custom_call.1} parent=5 // pred_check
        _
      $region10: #{tpu_custom_call.1} parent=5 // pred_check_branch
        %209 = sbr.rel (%p206) target = $region12
      $region11: #{tpu_custom_call.1} parent=5 // pred_region
        %s210 = ssub.s32 %s18, 1
        // Predicated region
        $region13: #{tpu_custom_call.1} parent=11 // pred_check
          %p211 = pneg %p65
        $region14: #{tpu_custom_call.1} parent=11 // pred_check_branch
          %213 = sbr.rel (%p211) target = $region16
        $region15: #{tpu_custom_call.1} parent=11 // pred_region
          _
        $region16: #{tpu_custom_call.1} parent=11 // pred_fallthru
          _
        // Predicated region
        $region17: #{tpu_custom_call.1} parent=11 // pred_check
          %p214 = pneg %p86
        $region18: #{tpu_custom_call.1} parent=11 // pred_check_branch
          %216 = sbr.rel (%p214) target = $region20
        $region19: #{tpu_custom_call.1} parent=11 // pred_region
          _
        $region20: #{tpu_custom_call.1} parent=11 // pred_fallthru
          _
        // Predicated region
        $region21: #{tpu_custom_call.1} parent=11 // pred_check
          %p217 = pneg %p107
        $region22: #{tpu_custom_call.1} parent=11 // pred_check_branch
          %219 = sbr.rel (%p217) target = $region24
        $region23: #{tpu_custom_call.1} parent=11 // pred_region
          _
        $region24: #{tpu_custom_call.1} parent=11 // pred_fallthru
          _
        // Predicated region
        $region25: #{tpu_custom_call.1} parent=11 // pred_check
          %p220 = pneg %p128
        $region26: #{tpu_custom_call.1} parent=11 // pred_check_branch
          %222 = sbr.rel (%p220) target = $region28
        $region27: #{tpu_custom_call.1} parent=11 // pred_region
          _
        $region28: #{tpu_custom_call.1} parent=11 // pred_fallthru
          _
        // Predicated region
        $region29: #{tpu_custom_call.1} parent=11 // pred_check
          %p223 = pneg %p149
        $region30: #{tpu_custom_call.1} parent=11 // pred_check_branch
          %225 = sbr.rel (%p223) target = $region32
        $region31: #{tpu_custom_call.1} parent=11 // pred_region
          _
        $region32: #{tpu_custom_call.1} parent=11 // pred_fallthru
          _
        // Predicated region
        $region33: #{tpu_custom_call.1} parent=11 // pred_check
          %p226 = pneg %p170
        $region34: #{tpu_custom_call.1} parent=11 // pred_check_branch
          %228 = sbr.rel (%p226) target = $region36
        $region35: #{tpu_custom_call.1} parent=11 // pred_region
          _
        $region36: #{tpu_custom_call.1} parent=11 // pred_fallthru
          _
      $region12: #{tpu_custom_call.1} parent=5 // pred_fallthru
        _
      %p229 = scmp.lt.s32.totalorder %s18, 2
      // Predicated region
      $region37: #{tpu_custom_call.1} parent=5 // pred_check
        %p230 = pneg %p229
      $region38: #{tpu_custom_call.1} parent=5 // pred_check_branch
        %232 = sbr.rel (%p230) target = $region40
      $region39: #{tpu_custom_call.1} parent=5 // pred_region
        // Predicated region
        $region41: #{tpu_custom_call.1} parent=39 // pred_check
          %p233 = pneg %p38
        $region42: #{tpu_custom_call.1} parent=39 // pred_check_branch
          %235 = sbr.rel (%p233) target = $region44
        $region43: #{tpu_custom_call.1} parent=39 // pred_region
          %s236 = smul.u32 2, %s18
          %p237 = scmp.lt.s32.totalorder %s236, 3
          %s238 = scalar_select %p237, %s236, 3
          %s239 = scalar_lea.vmem %s0, %s238
          %s240 = smul.u32 2, %s18
        $region44: #{tpu_custom_call.1} parent=39 // pred_fallthru
          _
      $region40: #{tpu_custom_call.1} parent=5 // pred_fallthru
        _
      %p241 = scmp.le.s32.totalorder 1, %s18
      %p242 = scmp.lt.s32.totalorder %s18, 3
      %p243 = pnand %p241, %p242
      %p244 = pneg %p243
      // Predicated region
      $region45: #{tpu_custom_call.1} parent=5 // pred_check
        _
      $region46: #{tpu_custom_call.1} parent=5 // pred_check_branch
        %246 = sbr.rel (%p243) target = $region48
      $region47: #{tpu_custom_call.1} parent=5 // pred_region
        %s247 = ssub.s32 %s18, 1
        %s248 = smul.u32 2, %s23
        %p249 = scmp.lt.s32.totalorder %s248, 3
        %s250 = scalar_select %p249, %s248, 3
        %s251 = scalar_lea.vmem %s0, %s250
        %p252 = pneg %p44
        %p253 = pneg %p41
        %p254 = pneg %p65
        %p255 = pneg %p62
        %p256 = pneg %p86
        %p257 = pneg %p83
        %p258 = pneg %p107
        %p259 = pneg %p104
        %p260 = pneg %p128
        %p261 = pneg %p125
        %p262 = pneg %p149
        %p263 = pneg %p146
        %p264 = pneg %p170
        %p265 = pneg %p167
        %p266 = pneg %p196
        %p267 = pneg %p193
        %s268 = sand.u32 %s183, 1
        %s269 = scalar_lea.sflag [#allocation4], %s268
        %s270 = sand.u32 %s183, 1
        %s271 = smul.addr %s270, 2
        %s272 = scalar_lea.vmem [#allocation3], %s271
        %s273 = smul.u32 2, %s23
        %p274 = scmp.lt.s32.totalorder %s273, 3
        %s275 = scalar_select %p274, %s273, 3
        %s276 = scalar_lea.vmem %s0, %s275
        %s277 = smul.u32 2, %s23
        %s278 = smul.u32 2, %s23
        %v279 = vld [vmem:[%s276] sm:$0x3]
        %v280 = vld [vmem:[%s1] sm:$0xff]
        %v281 = vld [vmem:[%s1 + $0x8] sm:$0xff]
        %v282 = vld [vmem:[%s1 + $0x10] sm:$0xff]
        %v283 = vld [vmem:[%s1 + $0x18] sm:$0xff]
        %v284 = vld [vmem:[%s2] sm:$0xff]
        %v285 = vld [vmem:[%s2 + $0x8] sm:$0xff]
        %v286 = vld [vmem:[%s2 + $0x10] sm:$0xff]
        %v287 = vld [vmem:[%s2 + $0x18] sm:$0xff]
        %289 = vset.pattern.permute.xlu0 0
        %290 = vperm.xlu0 %289, %v280
        %v291 = vpop.permute.xlu0 %290
        %294 = vset.pattern.permute.xlu0 0
        %295 = vperm.xlu0 %294, %v281
        %v296 = vpop.permute.xlu0 %295
        %299 = vset.pattern.permute.xlu0 0
        %300 = vperm.xlu0 %299, %v282
        %v301 = vpop.permute.xlu0 %300
        %304 = vset.pattern.permute.xlu0 0
        %305 = vperm.xlu0 %304, %v283
        %v306 = vpop.permute.xlu0 %305
        %v309 = vlaneseq
        %v310 = vshrl.u32 %v309, 7
        %v311 = vsub.s32 0, %v310
        %v312 = vrot.slane %v279, %v311
        %v313 = vlaneseq
        %v314 = vshrl.u32 %v313, 7
        %v315 = vsub.s32 1, %v314
        %v316 = vrot.slane %v279, %v315
        %v319 = vmul.f32 %v291, %v312
        %v320 = vmul.f32 %v291, %v316
        %v321 = vmul.f32 %v296, %v312
        %v322 = vmul.f32 %v296, %v316
        %v323 = vmul.f32 %v301, %v312
        %v324 = vmul.f32 %v301, %v316
        %v325 = vmul.f32 %v306, %v312
        %v326 = vmul.f32 %v306, %v316
        %328 = vset.pattern.permute.xlu0 0
        %329 = vperm.xlu0 %328, %v284
        %v330 = vpop.permute.xlu0 %329
        %333 = vset.pattern.permute.xlu0 0
        %334 = vperm.xlu0 %333, %v285
        %v335 = vpop.permute.xlu0 %334
        %338 = vset.pattern.permute.xlu0 0
        %339 = vperm.xlu0 %338, %v286
        %v340 = vpop.permute.xlu0 %339
        %343 = vset.pattern.permute.xlu0 0
        %344 = vperm.xlu0 %343, %v287
        %v345 = vpop.permute.xlu0 %344
        %v347 = vadd.f32 %v319, %v330
        %v348 = vadd.f32 %v320, %v330
        %v349 = vadd.f32 %v321, %v335
        %v350 = vadd.f32 %v322, %v335
        %v351 = vadd.f32 %v323, %v340
        %v352 = vadd.f32 %v324, %v340
        %v353 = vadd.f32 %v325, %v345
        %v354 = vadd.f32 %v326, %v345
        %v355 = vtanh.pop %v347
        %v356 = vtanh.pop %v348
        %v357 = vtanh.pop %v349
        %v358 = vtanh.pop %v350
        %v359 = vtanh.pop %v351
        %v360 = vtanh.pop %v352
        %v361 = vtanh.pop %v353
        %v362 = vtanh.pop %v354
        %v363 = vld [vmem:[%s3] sm:$0xff]
        %v364 = vld [vmem:[%s3 + $0x8] sm:$0xff]
        %v365 = vld [vmem:[%s3 + $0x10] sm:$0xff]
        %v366 = vld [vmem:[%s3 + $0x18] sm:$0xff]
        %v367 = vld [vmem:[%s4] sm:$0xff]
        %v368 = vld [vmem:[%s4 + $0x8] sm:$0xff]
        %v369 = vld [vmem:[%s4 + $0x10] sm:$0xff]
        %v370 = vld [vmem:[%s4 + $0x18] sm:$0xff]
        %372 = vset.pattern.permute.xlu0 0
        %373 = vperm.xlu0 %372, %v367
        %v374 = vpop.permute.xlu0 %373
        %377 = vset.pattern.permute.xlu0 0
        %378 = vperm.xlu0 %377, %v368
        %v379 = vpop.permute.xlu0 %378
        %382 = vset.pattern.permute.xlu0 0
        %383 = vperm.xlu0 %382, %v369
        %v384 = vpop.permute.xlu0 %383
        %387 = vset.pattern.permute.xlu0 0
        %388 = vperm.xlu0 %387, %v370
        %v389 = vpop.permute.xlu0 %388
        %vm391 = vcmask 261120
        %v393 = vsel %vm391, %v363, 0
        %v396 = vsel %vm391, %v364, 0
        %v399 = vsel %vm391, %v365, 0
        %v402 = vsel %vm391, %v366, 0
        %404 = vmatprep.subr.mxu0 %v356
        %405 = vmatpush1.msra.mxu0 %v355
        %406 = vmatprep.subr.mxu0 %v358
        %407 = vmatpush1.msra.mxu0 %v357
        %408 = vmatprep.subr.mxu0 %v360
        %409 = vmatpush1.msra.mxu0 %v359
        %410 = vmatprep.subr.mxu0 %v362
        %411 = vmatpush1.msra.mxu0 %v361
        %412 = vmatprep.subr.mxu0 0.0
        %413 = vmatpush1.msra.mxu0 0.0
        %414 = vmatprep.subr.mxu0 0.0
        %415 = vmatpush1.msra.mxu0 0.0
        %416 = vmatprep.subr.mxu0 0.0
        %417 = vmatpush1.msra.mxu0 0.0
        %418 = vmatprep.subr.mxu0 0.0
        %419 = vmatpush1.msra.mxu0 0.0
        %420 = vmatprep.subr.mxu0 0.0
        %421 = vmatpush1.msra.mxu0 0.0
        %422 = vmatprep.subr.mxu0 0.0
        %423 = vmatpush1.msra.mxu0 0.0
        %424 = vmatprep.subr.mxu0 0.0
        %425 = vmatpush1.msra.mxu0 0.0
        %426 = vmatprep.subr.mxu0 0.0
        %427 = vmatpush1.msra.mxu0 0.0
        %428 = vmatprep.subr.mxu0 0.0
        %429 = vmatpush1.msra.mxu0 0.0
        %430 = vmatprep.subr.mxu0 0.0
        %431 = vmatpush1.msra.mxu0 0.0
        %432 = vmatprep.subr.mxu0 0.0
        %433 = vmatpush1.msra.mxu0 0.0
        %434 = vmatprep.subr.mxu0 0.0
        %435 = vmatpush1.msra.mxu0 0.0
        %436 = vmatprep.subr.mxu0 0.0
        %437 = vmatpush1.msra.mxu0 0.0
        %438 = vmatprep.subr.mxu0 0.0
        %439 = vmatpush1.msra.mxu0 0.0
        %440 = vmatprep.subr.mxu0 0.0
        %441 = vmatpush1.msra.mxu0 0.0
        %442 = vmatprep.subr.mxu0 0.0
        %443 = vmatpush1.msra.mxu0 0.0
        %444 = vmatprep.subr.mxu0 0.0
        %445 = vmatpush1.msra.mxu0 0.0
        %446 = vmatprep.subr.mxu0 0.0
        %447 = vmatpush1.msra.mxu0 0.0
        %448 = vmatprep.subr.mxu0 0.0
        %449 = vmatpush1.msra.mxu0 0.0
        %450 = vmatprep.subr.mxu0 0.0
        %451 = vmatpush1.msra.mxu0 0.0
        %452 = vmatprep.subr.mxu0 0.0
        %453 = vmatpush1.msra.mxu0 0.0
        %454 = vmatprep.subr.mxu0 0.0
        %455 = vmatpush1.msra.mxu0 0.0
        %456 = vmatprep.subr.mxu0 0.0
        %457 = vmatpush1.msra.mxu0 0.0
        %458 = vmatprep.subr.mxu0 0.0
        %459 = vmatpush1.msra.mxu0 0.0
        %460 = vmatprep.subr.mxu0 0.0
        %461 = vmatpush1.msra.mxu0 0.0
        %462 = vmatprep.subr.mxu0 0.0
        %463 = vmatpush1.msra.mxu0 0.0
        %464 = vmatprep.subr.mxu0 0.0
        %465 = vmatpush1.msra.mxu0 0.0
        %466 = vmatprep.subr.mxu0 0.0
        %467 = vmatpush1.msra.mxu0 0.0
        %468 = vmatprep.mubr.f32.mxu0 0.0
        %469 = vmatmul.mubr.f32.gmra.mrb[0].mxu0 %v393
        %v470 = vpop.f32.mrb[0].mxu0
        %v471 = vadd.f32 %v374, %v470
        %v472 = vpop.f32.mrb[0].mxu0
        %v473 = vadd.f32 %v374, %v472
        %474 = vmatprep.mubr.f32.mxu0 0.0
        %475 = vmatmul.mubr.f32.gmra.mrb[0].mxu0 %v396
        %v476 = vpop.f32.mrb[0].mxu0
        %v477 = vadd.f32 %v379, %v476
        %v478 = vpop.f32.mrb[0].mxu0
        %v479 = vadd.f32 %v379, %v478
        %480 = vmatprep.mubr.f32.mxu0 0.0
        %481 = vmatmul.mubr.f32.gmra.mrb[0].mxu0 %v399
        %v482 = vpop.f32.mrb[0].mxu0
        %v483 = vadd.f32 %v384, %v482
        %v484 = vpop.f32.mrb[0].mxu0
        %v485 = vadd.f32 %v384, %v484
        %486 = vmatprep.mubr.f32.mxu0 0.0
        %487 = vmatmul.mubr.f32.gmra.mrb[0].mxu0 %v402
        %v488 = vpop.f32.mrb[0].mxu0
        %v489 = vadd.f32 %v389, %v488
        %v490 = vpop.f32.mrb[0].mxu0
        %v491 = vadd.f32 %v389, %v490
        %492 = vdwg.mxu0
        %v493 = vtanh.pop %v471
        %v494 = vtanh.pop %v473
        %v495 = vtanh.pop %v477
        %v496 = vtanh.pop %v479
        %v497 = vtanh.pop %v483
        %v498 = vtanh.pop %v485
        %v499 = vtanh.pop %v489
        %v500 = vtanh.pop %v491
        %v501 = vld [vmem:[%s5] sm:$0x1]
        %v502 = vld [vmem:[#allocation2] sm:$0x1]
        %504 = vset.pattern.permute.xlu0 0
        %505 = vperm.xlu0 %504, %v502
        %v506 = vpop.permute.xlu0 %505
        %v508 = vlaneseq
        %v509 = vshrl.u32 %v508, 7
        %v510 = vsub.s32 0, %v509
        %v511 = vrot.slane %v506, %v510
        %v513 = vsel %vm391, %v501, 0
        %515 = vmatprep.subr.mxu0 %v494
        %516 = vmatpush1.msra.mxu0 %v493
        %517 = vmatprep.subr.mxu0 %v496
        %518 = vmatpush1.msra.mxu0 %v495
        %519 = vmatprep.subr.mxu0 %v498
        %520 = vmatpush1.msra.mxu0 %v497
        %521 = vmatprep.subr.mxu0 %v500
        %522 = vmatpush1.msra.mxu0 %v499
        %523 = vmatprep.subr.mxu0 0.0
        %524 = vmatpush1.msra.mxu0 0.0
        %525 = vmatprep.subr.mxu0 0.0
        %526 = vmatpush1.msra.mxu0 0.0
        %527 = vmatprep.subr.mxu0 0.0
        %528 = vmatpush1.msra.mxu0 0.0
        %529 = vmatprep.subr.mxu0 0.0
        %530 = vmatpush1.msra.mxu0 0.0
        %531 = vmatprep.subr.mxu0 0.0
        %532 = vmatpush1.msra.mxu0 0.0
        %533 = vmatprep.subr.mxu0 0.0
        %534 = vmatpush1.msra.mxu0 0.0
        %535 = vmatprep.subr.mxu0 0.0
        %536 = vmatpush1.msra.mxu0 0.0
        %537 = vmatprep.subr.mxu0 0.0
        %538 = vmatpush1.msra.mxu0 0.0
        %539 = vmatprep.subr.mxu0 0.0
        %540 = vmatpush1.msra.mxu0 0.0
        %541 = vmatprep.subr.mxu0 0.0
        %542 = vmatpush1.msra.mxu0 0.0
        %543 = vmatprep.subr.mxu0 0.0
        %544 = vmatpush1.msra.mxu0 0.0
        %545 = vmatprep.subr.mxu0 0.0
        %546 = vmatpush1.msra.mxu0 0.0
        %547 = vmatprep.subr.mxu0 0.0
        %548 = vmatpush1.msra.mxu0 0.0
        %549 = vmatprep.subr.mxu0 0.0
        %550 = vmatpush1.msra.mxu0 0.0
        %551 = vmatprep.subr.mxu0 0.0
        %552 = vmatpush1.msra.mxu0 0.0
        %553 = vmatprep.subr.mxu0 0.0
        %554 = vmatpush1.msra.mxu0 0.0
        %555 = vmatprep.subr.mxu0 0.0
        %556 = vmatpush1.msra.mxu0 0.0
        %557 = vmatprep.subr.mxu0 0.0
        %558 = vmatpush1.msra.mxu0 0.0
        %559 = vmatprep.subr.mxu0 0.0
        %560 = vmatpush1.msra.mxu0 0.0
        %561 = vmatprep.subr.mxu0 0.0
        %562 = vmatpush1.msra.mxu0 0.0
        %563 = vmatprep.subr.mxu0 0.0
        %564 = vmatpush1.msra.mxu0 0.0
        %565 = vmatprep.subr.mxu0 0.0
        %566 = vmatpush1.msra.mxu0 0.0
        %567 = vmatprep.subr.mxu0 0.0
        %568 = vmatpush1.msra.mxu0 0.0
        %569 = vmatprep.subr.mxu0 0.0
        %570 = vmatpush1.msra.mxu0 0.0
        %571 = vmatprep.subr.mxu0 0.0
        %572 = vmatpush1.msra.mxu0 0.0
        %573 = vmatprep.subr.mxu0 0.0
        %574 = vmatpush1.msra.mxu0 0.0
        %575 = vmatprep.subr.mxu0 0.0
        %576 = vmatpush1.msra.mxu0 0.0
        %577 = vmatprep.subr.mxu0 0.0
        %578 = vmatpush1.msra.mxu0 0.0
        %579 = vmatprep.mubr.f32.mxu0 0.0
        %580 = vmatmul.mubr.f32.gmra.mrb[0].mxu0 %v513
        %v581 = vpop.f32.mrb[0].mxu0
        %v582 = vadd.f32 %v511, %v581
        %v583 = vpop.f32.mrb[0].mxu0
        %v584 = vadd.f32 %v511, %v583
        %585 = vdwg.mxu0
        %v588 = vcombine.low %v582, %v584
        %v590 = vunpack.c.l.s4 1966171168
        %v591 = vunpack.c.0.s8 %v590
        %v592 = vlaneseq
        %v593 = vshrl.u32 %v592, 7
        %v594 = vsub.s32 %v591, %v593
        %v595 = vrot.slane %v588, %v594
        %v597 = vunpack.c.l.s4 1966171168
        %v598 = vunpack.c.0.s8 %v597
        %v599 = vlaneseq
        %v600 = vshrl.u32 %v599, 7
        %v601 = vsub.s32 %v598, %v600
        %v602 = vrot.slane %v595, %v601
        %v604 = vlaneseq
        %vm605 = vcmp.ge.s32.totalorder %v604, 0
        %vm606 = vcmp.lt.s32.totalorder %v604, 256
        %vm607 = vmand %vm605, %vm606
        %608 = vst.msk [vmem:[%s272] sm:$0x3] %vm607, %v602
        %s609 = sand.u32 %s183, 1
        %s610 = scalar_lea.sflag [#allocation4], %s609
        %s611 = sand.u32 %s183, 1
        %s612 = smul.addr %s611, 2
        %s613 = scalar_lea.vmem [#allocation3], %s612
        // Predicated region
        $region49: #{tpu_custom_call.1} parent=47 // pred_check
          %p614 = pneg %p193
        $region50: #{tpu_custom_call.1} parent=47 // pred_check_branch
          %616 = sbr.rel (%p614) target = $region52
        $region51: #{tpu_custom_call.1} parent=47 // pred_region
          %s617 = smul.u32 2, %s23
          %s619 = ssub.s32 32, 32
          %620 = vsyncadd %s610, %s619
          %s621 = smul.addr %s617, 16
          %s622 = scalar_lea.hbm %s7, %s621
          %s624 = sshll.u32 %s613, 4
          %s625 = int_to_ptr.vmem [resolvable:$true] %s624
          %627 = dma.vmem_to_hbm [thread:$0]  %s625, 32, %s622, %s610
        $region52: #{tpu_custom_call.1} parent=47 // pred_fallthru
          _
      $region48: #{tpu_custom_call.1} parent=5 // pred_fallthru
        _
      %p628 = scmp.le.s32.totalorder 2, %s18
      // Predicated region
      $region53: #{tpu_custom_call.1} parent=5 // pred_check
        %p629 = pneg %p628
      $region54: #{tpu_custom_call.1} parent=5 // pred_check_branch
        %631 = sbr.rel (%p629) target = $region56
      $region55: #{tpu_custom_call.1} parent=5 // pred_region
        %s632 = ssub.s32 %s18, 2
        // Predicated region
        $region57: #{tpu_custom_call.1} parent=55 // pred_check
          %p633 = pneg %p199
        $region58: #{tpu_custom_call.1} parent=55 // pred_check_branch
          %635 = sbr.rel (%p633) target = $region60
        $region59: #{tpu_custom_call.1} parent=55 // pred_region
          %s636 = sand.u32 %s184, 1
          %s637 = scalar_lea.sflag [#allocation4], %s636
          %s638 = sand.u32 %s184, 1
          %s639 = smul.addr %s638, 2
          %s640 = scalar_lea.vmem [#allocation3], %s639
          %641 = dma.done %s637, 32
        $region60: #{tpu_custom_call.1} parent=55 // pred_fallthru
          _
      $region56: #{tpu_custom_call.1} parent=5 // pred_fallthru
        _
    $region6: #{tpu_custom_call.1} parent=1 // loop_footer
      %s22 = sadd.s32 1, %s18
    $region7: #{tpu_custom_call.1} parent=1 // loop_footer_branch
      %17 = sbr.rel target = $region3
    $region8: #{tpu_custom_call.1} parent=1 // loop_exit
      _
    %642 = vsyncpa [#allocation4], 1
    %s643 = scalar_lea.sflag [#allocation4], 1
    %644 = vsyncpa %s643, 1

</llo_original>
